<compile_context>
chip_gen: v7x
topology: tpu7x:2x2x1
jax: 0.10.0
libtpu: 0.0.40
codegen_flags: <defaults>
</compile_context>

<pallas_src>
import itertools

import jax
import jax.numpy as jnp
from jax import lax
from jax.experimental import pallas as pl
from jax.experimental.pallas import tpu as pltpu  # noqa: F401  (no TPU-specific params needed in this fused kernel)


# ------------------------------- config --------------------------------------
B = 2
IN_DIM = 32          # C
OUT_DIM = 32
KEY_DIM = 16
NUM_HEADS = 2
ATTN_RATIO = 2
STRIDE = 2
RESOLUTION = 8       # input grid  -> N  = 64
RESOLUTION_ = 4      # output grid -> N_ = 16

N = RESOLUTION * RESOLUTION
N_ = RESOLUTION_ * RESOLUTION_
D = ATTN_RATIO * KEY_DIM            # per-head value dim
DH = D * NUM_HEADS                  # concat value dim
NH_KD = KEY_DIM * NUM_HEADS
H_KV = DH + NH_KD                   # kv projection output dim
PROJ_DIM = NH_KD + H_KV             # packed projection width (= 128 here)
SCALE = KEY_DIM ** (-0.5)
BN_EPS = 1e-5


# ------------------------------ Pallas kernel ---------------------------------
def _attn_subsample_kernel(x_ref, w_ref, b_ref, sel_ref, bias_ref, wp_ref,
                           pb_ref, o_ref):
    # x_ref   : (B, N, C)   f32   input tokens, both batches
    # w_ref   : (C, 128)    bf16  packed [Q_h0 Q_h1 | K_h0 K_h1 | V_h0 V_h1]
    #                             (BN scales folded; attention SCALE folded into Q)
    # b_ref   : (1, 128)    f32   packed additive shifts (SCALE folded into Q part)
    # sel_ref : (B*N_, B*N) bf16  one-hot query-row selection (folded Subsample)
    # bias_ref: (B*H*N_, N) f32   relative-position bias, pre-stacked per (b, h)
    # wp_ref  : (DH, OUT)   bf16  output projection (BN scale and 1/6 folded in)
    # pb_ref  : (1, OUT)    f32   output shift
    # o_ref   : (B, N_, OUT) f32
    x = x_ref[...].reshape(B * N, IN_DIM).astype(jnp.bfloat16)       # (128, 32)

    # One packed projection GEMM for q, k, v of all heads and both batches.
    proj = jnp.dot(x, w_ref[...],
                   preferred_element_type=jnp.float32) + b_ref[...]  # (128, 128)
    proj_bf = proj.astype(jnp.bfloat16)

    # Query path: Subsample folded in as a constant one-hot row-select matmul.
    q = jnp.dot(sel_ref[...], proj_bf[:, :NH_KD],
                preferred_element_type=jnp.float32)                  # (B*N_, NH_KD)
    q = q.astype(jnp.bfloat16)
    k = proj_bf[:, NH_KD:2 * NH_KD]                                  # (B*N, H*KD)
    v = proj_bf[:, 2 * NH_KD:]                                       # (B*N, DH)

    # Attention scores for every (batch, head) pair, stacked along rows.
    s_parts = []
    for b in range(B):
        for h in range(NUM_HEADS):
            qh = q[b * N_:(b + 1) * N_, h * KEY_DIM:(h + 1) * KEY_DIM]
            kh = k[b * N:(b + 1) * N, h * KEY_DIM:(h + 1) * KEY_DIM]
            # q @ k^T without materializing k.T (contract the shared last dim).
            s_parts.append(lax.dot_general(
                qh, kh, (((1,), (1,)), ((), ())),
                preferred_element_type=jnp.float32))                 # (N_, N)
    s = jnp.concatenate(s_parts, axis=0) + bias_ref[...]             # (B*H*N_, N)

    # Softmax batched over all (batch, head) pairs in ONE elementwise pass.
    s = s - jnp.max(s, axis=-1, keepdims=True)
    p = jnp.exp(s)
    p = p / jnp.sum(p, axis=-1, keepdims=True)                       # exact divide
    p = p.astype(jnp.bfloat16)

    # attn @ v per (batch, head); heads laid out along lanes so the output
    # projection becomes a single GEMM over the concatenated head dim.
    o_rows = []
    for b in range(B):
        o_heads = []
        for h in range(NUM_HEADS):
            ph = p[(b * NUM_HEADS + h) * N_:(b * NUM_HEADS + h + 1) * N_, :]
            vh = v[b * N:(b + 1) * N, h * D:(h + 1) * D]
            o_heads.append(jnp.dot(ph, vh,
                                   preferred_element_type=jnp.float32))  # (N_, D)
        o_rows.append(jnp.concatenate(o_heads, axis=1))                  # (N_, DH)
    o = jnp.concatenate(o_rows, axis=0)                                  # (B*N_, DH)

    # Hardswish (1/6 folded into wp) in one pass, then the output projection
    # for BOTH batches as a single (B*N_, DH) @ (DH, OUT) GEMM.
    a = (o * jnp.clip(o + 3.0, 0.0, 6.0)).astype(jnp.bfloat16)
    out = jnp.dot(a, wp_ref[...],
                  preferred_element_type=jnp.float32) + pb_ref[...]      # (B*N_, OUT)
    o_ref[...] = out.reshape(B, N_, OUT_DIM)


# ------------------------------ wrapper ---------------------------------------
def attention_subsample_pallas(x, params, bias_stacked):
    """x: (B, N, C) float32; bias_stacked: (B*H*N_, N). Returns (B, N_, out_dim)."""
    # No grid: one fused step handles both batches; all operands fit in VMEM
    # whole, so default whole-array VMEM refs are used.  (A grid=(B,) "parallel"
    # split is only a potential A/B on v7x's two TensorCores.)
    return pl.pallas_call(
        _attn_subsample_kernel,
        out_shape=jax.ShapeDtypeStruct((B, N_, OUT_DIM), jnp.float32),
    )(x, params["w_cat"], params["b_cat"], params["sel"],
      bias_stacked, params["wp_f"], params["pb_f"])


# ------------------------ deterministic parameter setup -----------------------
def _fused_bn(key, dim):
    k1, k2, k3, k4 = jax.random.split(key, 4)
    gamma = 1.0 + 0.1 * jax.random.normal(k1, (dim,), jnp.float32)
    beta = 0.1 * jax.random.normal(k2, (dim,), jnp.float32)
    mean = 0.1 * jax.random.normal(k3, (dim,), jnp.float32)
    var = 1.0 + 0.1 * jnp.abs(jax.random.normal(k4, (dim,), jnp.float32))
    scale = gamma / jnp.sqrt(var + BN_EPS)
    shift = beta - mean * scale
    return scale, shift


def _bias_idxs():
    points = list(itertools.product(range(RESOLUTION), range(RESOLUTION)))
    points_ = list(itertools.product(range(RESOLUTION_), range(RESOLUTION_)))
    offsets, idxs = {}, []
    for p1 in points_:
        for p2 in points:
            off = (abs(p1[0] * STRIDE - p2[0]), abs(p1[1] * STRIDE - p2[1]))
            if off not in offsets:
                offsets[off] = len(offsets)
            idxs.append(offsets[off])
    return jnp.array(idxs, dtype=jnp.int32).reshape(N_, N), len(offsets)


def _num_offsets():
    return _bias_idxs()[1]


def _subsample_selection():
    """Constant one-hot (B*N_, B*N) matrix implementing the query Subsample."""
    q_tok = [STRIDE * RESOLUTION * i + STRIDE * j
             for i in range(RESOLUTION_) for j in range(RESOLUTION_)]
    rows = jnp.array([b * N + t for b in range(B) for t in q_tok], jnp.int32)
    return jax.nn.one_hot(rows, B * N, dtype=jnp.bfloat16)           # (B*N_, B*N)


def build_params(key):
    ks = jax.random.split(key, 7)
    w_kv = 0.02 * jax.random.normal(ks[0], (IN_DIM, H_KV), jnp.float32)
    w_q = 0.02 * jax.random.normal(ks[1], (IN_DIM, NH_KD), jnp.float32)
    w_p = 0.02 * jax.random.normal(ks[2], (DH, OUT_DIM), jnp.float32)
    kv_scale, kv_shift = _fused_bn(ks[3], H_KV)
    q_scale, q_shift = _fused_bn(ks[4], NH_KD)
    p_scale, p_shift = _fused_bn(ks[5], OUT_DIM)
    attn_biases = 0.02 * jax.random.normal(
        ks[6], (NUM_HEADS, _num_offsets()), jnp.float32)

    # ---- kernel-side constant folding ----------------------------------
    # BN scales into the weight columns; attention SCALE into BOTH the q weight
    # and the q shift; Hardswish 1/6 and output BN scale into wp.
    wq_f = w_q * (q_scale * SCALE)[None, :]
    bq_f = q_shift * SCALE
    wkv_f = w_kv * kv_scale[None, :]
    bkv_f = kv_shift

    # Reorder the interleaved per-head [K_h V_h] kv columns into blocks
    # [K_h0 K_h1 | V_h0 V_h1] so in-kernel slices are contiguous and aligned.
    kd = KEY_DIM + D
    k_w = [wkv_f[:, h * kd:h * kd + KEY_DIM] for h in range(NUM_HEADS)]
    v_w = [wkv_f[:, h * kd + KEY_DIM:(h + 1) * kd] for h in range(NUM_HEADS)]
    k_b = [bkv_f[h * kd:h * kd + KEY_DIM] for h in range(NUM_HEADS)]
    v_b = [bkv_f[h * kd + KEY_DIM:(h + 1) * kd] for h in range(NUM_HEADS)]

    w_cat = jnp.concatenate([wq_f] + k_w + v_w, axis=1)              # (C, 128)
    b_cat = jnp.concatenate([bq_f] + k_b + v_b).reshape(1, PROJ_DIM)

    params = {
        # raw parameters (used by the pure-JAX reference)
        "w_kv": w_kv, "w_q": w_q, "w_p": w_p,
        "kv_scale": kv_scale, "kv_shift": kv_shift,
        "q_scale": q_scale, "q_shift": q_shift,
        "p_scale": p_scale, "p_shift": p_shift,
        "attn_biases": attn_biases,
        # folded parameters (used by the kernel): matmul operands are bf16
        # (MXU-native); additive shifts stay f32 (added after f32 accumulation).
        "w_cat": w_cat.astype(jnp.bfloat16),
        "b_cat": b_cat,
        "sel": _subsample_selection(),
        "wp_f": (w_p * (p_scale / 6.0)[None, :]).astype(jnp.bfloat16),
        "pb_f": p_shift.reshape(1, OUT_DIM),
    }
    return params


# ------------------------------ pure-JAX reference ----------------------------
def reference(x, params, bias_full):
    kv = x @ params["w_kv"] * params["kv_scale"] + params["kv_shift"]
    kv = kv.reshape(B, N, NUM_HEADS, KEY_DIM + D)
    k = kv[..., :KEY_DIM].transpose(0, 2, 1, 3)
    v = kv[..., KEY_DIM:].transpose(0, 2, 1, 3)
    xq = x.reshape(B, RESOLUTION, RESOLUTION, IN_DIM)[:, ::STRIDE, ::STRIDE]
    xq = xq.reshape(B, N_, IN_DIM)
    q = xq @ params["w_q"] * params["q_scale"] + params["q_shift"]
    q = q.reshape(B, N_, NUM_HEADS, KEY_DIM).transpose(0, 2, 1, 3)
    attn = jnp.einsum("bhqd,bhkd->bhqk", q, k) * SCALE + bias_full[None]
    attn = jax.nn.softmax(attn, axis=-1)
    o = jnp.einsum("bhqk,bhkd->bhqd", attn, v)
    o = o.transpose(0, 2, 1, 3).reshape(B, N_, DH)
    a = o * jnp.clip(o + 3.0, 0.0, 6.0) / 6.0
    return a @ params["w_p"] * params["p_scale"] + params["p_shift"]


# ----------------------------------- main --------------------------------------
if __name__ == "__main__":
    key = jax.random.PRNGKey(0)
    kx, kp = jax.random.split(key)
    x = jax.random.normal(kx, (B, N, IN_DIM), jnp.float32)
    params = build_params(kp)

    idxs, _ = _bias_idxs()
    bias_full = params["attn_biases"][:, idxs]        # (H, N_, N) eval-mode `ab`
    # Pre-stack the bias per (batch, head) row-block once (constant input).
    bias_stacked = jnp.tile(bias_full.reshape(NUM_HEADS * N_, N), (B, 1))

    out = attention_subsample_pallas(x, params, bias_stacked)
    out = jax.block_until_ready(out)

    ref = reference(x, params, bias_full)
    assert out.shape == (B, N_, OUT_DIM)
    # Tolerance accounts for bf16 matmul operands in the kernel (MXU-native)
    # vs the f32 reference; observed error is far below this bound.
    max_diff = jnp.max(jnp.abs(out - ref))
    assert jnp.allclose(out, ref, atol=5e-3, rtol=5e-3), (
        f"max abs diff {max_diff}")
    print("KERNEL_OK")
</pallas_src>

<mosaic_0001>
module attributes {stable_mosaic.version = 11 : i64} {
  func.func @_attn_subsample_kernel(%arg0: memref<2x64x32xf32, #tpu.memory_space<vmem>>, %arg1: memref<32x128xbf16, #tpu.memory_space<vmem>>, %arg2: memref<1x128xf32, #tpu.memory_space<vmem>>, %arg3: memref<32x128xbf16, #tpu.memory_space<vmem>>, %arg4: memref<64x64xf32, #tpu.memory_space<vmem>>, %arg5: memref<64x32xbf16, #tpu.memory_space<vmem>>, %arg6: memref<1x32xf32, #tpu.memory_space<vmem>>, %arg7: memref<2x16x32xf32, #tpu.memory_space<vmem>>) attributes {dimension_semantics = [], scalar_prefetch = 0 : i64, scratch_operands = 0 : i64, tpu.core_type = #tpu.core_type<tc>} {
    %c0 = arith.constant 0 : index
    %c0_0 = arith.constant 0 : index
    %c0_1 = arith.constant 0 : index
    %0 = vector.load %arg0[%c0, %c0_0, %c0_1] : memref<2x64x32xf32, #tpu.memory_space<vmem>>, vector<2x64x32xf32>
    %1 = vector.shape_cast %0 : vector<2x64x32xf32> to vector<128x32xf32>
    %2 = arith.truncf %1 : vector<128x32xf32> to vector<128x32xbf16>
    %c0_2 = arith.constant 0 : index
    %c0_3 = arith.constant 0 : index
    %3 = vector.load %arg1[%c0_2, %c0_3] : memref<32x128xbf16, #tpu.memory_space<vmem>>, vector<32x128xbf16>
    %cst = arith.constant dense<0.000000e+00> : vector<128x128xf32>
    %4 = tpu.matmul %2, %3, %cst {dimension_numbers = #tpu.dot_dimension_numbers<[1], [0], [0], [1], [0, 0, 1, 1], [], []>} : vector<128x32xbf16>, vector<32x128xbf16>, vector<128x128xf32> -> vector<128x128xf32>
    %c0_4 = arith.constant 0 : index
    %c0_5 = arith.constant 0 : index
    %5 = vector.load %arg2[%c0_4, %c0_5] : memref<1x128xf32, #tpu.memory_space<vmem>>, vector<1x128xf32>
    %6 = vector.broadcast %5 : vector<1x128xf32> to vector<128x128xf32>
    %7 = arith.addf %4, %6 : vector<128x128xf32>
    %8 = arith.truncf %7 : vector<128x128xf32> to vector<128x128xbf16>
    %c0_6 = arith.constant 0 : index
    %c0_7 = arith.constant 0 : index
    %9 = vector.load %arg3[%c0_6, %c0_7] : memref<32x128xbf16, #tpu.memory_space<vmem>>, vector<32x128xbf16>
    %10 = vector.extract_strided_slice %8 {offsets = [0, 0], sizes = [128, 32], strides = [1, 1]} : vector<128x128xbf16> to vector<128x32xbf16>
    %cst_8 = arith.constant dense<0.000000e+00> : vector<32x32xf32>
    %11 = tpu.matmul %9, %10, %cst_8 {dimension_numbers = #tpu.dot_dimension_numbers<[1], [0], [0], [1], [0, 0, 1, 1], [], []>} : vector<32x128xbf16>, vector<128x32xbf16>, vector<32x32xf32> -> vector<32x32xf32>
    %12 = arith.truncf %11 : vector<32x32xf32> to vector<32x32xbf16>
    %13 = vector.extract_strided_slice %8 {offsets = [0, 32], sizes = [128, 32], strides = [1, 1]} : vector<128x128xbf16> to vector<128x32xbf16>
    %14 = vector.extract_strided_slice %8 {offsets = [0, 64], sizes = [128, 64], strides = [1, 1]} : vector<128x128xbf16> to vector<128x64xbf16>
    %15 = vector.extract_strided_slice %12 {offsets = [0, 0], sizes = [16, 16], strides = [1, 1]} : vector<32x32xbf16> to vector<16x16xbf16>
    %16 = vector.extract_strided_slice %13 {offsets = [0, 0], sizes = [64, 16], strides = [1, 1]} : vector<128x32xbf16> to vector<64x16xbf16>
    %cst_9 = arith.constant dense<0.000000e+00> : vector<16x64xf32>
    %17 = tpu.matmul %15, %16, %cst_9 {dimension_numbers = #tpu.dot_dimension_numbers<[1], [1], [0], [0], [0, 0, 1, 0], [], []>} : vector<16x16xbf16>, vector<64x16xbf16>, vector<16x64xf32> -> vector<16x64xf32>
    %18 = vector.extract_strided_slice %12 {offsets = [0, 16], sizes = [16, 16], strides = [1, 1]} : vector<32x32xbf16> to vector<16x16xbf16>
    %19 = vector.extract_strided_slice %13 {offsets = [0, 16], sizes = [64, 16], strides = [1, 1]} : vector<128x32xbf16> to vector<64x16xbf16>
    %cst_10 = arith.constant dense<0.000000e+00> : vector<16x64xf32>
    %20 = tpu.matmul %18, %19, %cst_10 {dimension_numbers = #tpu.dot_dimension_numbers<[1], [1], [0], [0], [0, 0, 1, 0], [], []>} : vector<16x16xbf16>, vector<64x16xbf16>, vector<16x64xf32> -> vector<16x64xf32>
    %21 = vector.extract_strided_slice %12 {offsets = [16, 0], sizes = [16, 16], strides = [1, 1]} : vector<32x32xbf16> to vector<16x16xbf16>
    %22 = vector.extract_strided_slice %13 {offsets = [64, 0], sizes = [64, 16], strides = [1, 1]} : vector<128x32xbf16> to vector<64x16xbf16>
    %cst_11 = arith.constant dense<0.000000e+00> : vector<16x64xf32>
    %23 = tpu.matmul %21, %22, %cst_11 {dimension_numbers = #tpu.dot_dimension_numbers<[1], [1], [0], [0], [0, 0, 1, 0], [], []>} : vector<16x16xbf16>, vector<64x16xbf16>, vector<16x64xf32> -> vector<16x64xf32>
    %24 = vector.extract_strided_slice %12 {offsets = [16, 16], sizes = [16, 16], strides = [1, 1]} : vector<32x32xbf16> to vector<16x16xbf16>
    %25 = vector.extract_strided_slice %13 {offsets = [64, 16], sizes = [64, 16], strides = [1, 1]} : vector<128x32xbf16> to vector<64x16xbf16>
    %cst_12 = arith.constant dense<0.000000e+00> : vector<16x64xf32>
    %26 = tpu.matmul %24, %25, %cst_12 {dimension_numbers = #tpu.dot_dimension_numbers<[1], [1], [0], [0], [0, 0, 1, 0], [], []>} : vector<16x16xbf16>, vector<64x16xbf16>, vector<16x64xf32> -> vector<16x64xf32>
    %27 = tpu.concatenate %17, %20, %23, %26 in 0 : vector<16x64xf32>, vector<16x64xf32>, vector<16x64xf32>, vector<16x64xf32> -> vector<64x64xf32>
    %c0_13 = arith.constant 0 : index
    %c0_14 = arith.constant 0 : index
    %28 = vector.load %arg4[%c0_13, %c0_14] : memref<64x64xf32, #tpu.memory_space<vmem>>, vector<64x64xf32>
    %29 = arith.addf %27, %28 : vector<64x64xf32>
    %cst_15 = arith.constant dense<0xFF800000> : vector<64xf32>
    %30 = vector.multi_reduction <maximumf>, %29, %cst_15 [1] : vector<64x64xf32> to vector<64xf32>
    %31 = vector.shape_cast %30 : vector<64xf32> to vector<64x1xf32>
    %32 = vector.broadcast %31 : vector<64x1xf32> to vector<64x64xf32>
    %33 = arith.subf %29, %32 : vector<64x64xf32>
    %34 = math.exp %33 : vector<64x64xf32>
    %cst_16 = arith.constant dense<0.000000e+00> : vector<64xf32>
    %35 = vector.multi_reduction <add>, %34, %cst_16 [1] : vector<64x64xf32> to vector<64xf32>
    %36 = vector.shape_cast %35 : vector<64xf32> to vector<64x1xf32>
    %37 = vector.broadcast %36 : vector<64x1xf32> to vector<64x64xf32>
    %38 = arith.divf %34, %37 : vector<64x64xf32>
    %39 = arith.truncf %38 : vector<64x64xf32> to vector<64x64xbf16>
    %40 = vector.extract_strided_slice %39 {offsets = [0, 0], sizes = [16, 64], strides = [1, 1]} : vector<64x64xbf16> to vector<16x64xbf16>
    %41 = vector.extract_strided_slice %14 {offsets = [0, 0], sizes = [64, 32], strides = [1, 1]} : vector<128x64xbf16> to vector<64x32xbf16>
    %cst_17 = arith.constant dense<0.000000e+00> : vector<16x32xf32>
    %42 = tpu.matmul %40, %41, %cst_17 {dimension_numbers = #tpu.dot_dimension_numbers<[1], [0], [0], [1], [0, 0, 1, 1], [], []>} : vector<16x64xbf16>, vector<64x32xbf16>, vector<16x32xf32> -> vector<16x32xf32>
    %43 = vector.extract_strided_slice %39 {offsets = [16, 0], sizes = [16, 64], strides = [1, 1]} : vector<64x64xbf16> to vector<16x64xbf16>
    %44 = vector.extract_strided_slice %14 {offsets = [0, 32], sizes = [64, 32], strides = [1, 1]} : vector<128x64xbf16> to vector<64x32xbf16>
    %cst_18 = arith.constant dense<0.000000e+00> : vector<16x32xf32>
    %45 = tpu.matmul %43, %44, %cst_18 {dimension_numbers = #tpu.dot_dimension_numbers<[1], [0], [0], [1], [0, 0, 1, 1], [], []>} : vector<16x64xbf16>, vector<64x32xbf16>, vector<16x32xf32> -> vector<16x32xf32>
    %46 = tpu.concatenate %42, %45 in 1 : vector<16x32xf32>, vector<16x32xf32> -> vector<16x64xf32>
    %47 = vector.extract_strided_slice %39 {offsets = [32, 0], sizes = [16, 64], strides = [1, 1]} : vector<64x64xbf16> to vector<16x64xbf16>
    %48 = vector.extract_strided_slice %14 {offsets = [64, 0], sizes = [64, 32], strides = [1, 1]} : vector<128x64xbf16> to vector<64x32xbf16>
    %cst_19 = arith.constant dense<0.000000e+00> : vector<16x32xf32>
    %49 = tpu.matmul %47, %48, %cst_19 {dimension_numbers = #tpu.dot_dimension_numbers<[1], [0], [0], [1], [0, 0, 1, 1], [], []>} : vector<16x64xbf16>, vector<64x32xbf16>, vector<16x32xf32> -> vector<16x32xf32>
    %50 = vector.extract_strided_slice %39 {offsets = [48, 0], sizes = [16, 64], strides = [1, 1]} : vector<64x64xbf16> to vector<16x64xbf16>
    %51 = vector.extract_strided_slice %14 {offsets = [64, 32], sizes = [64, 32], strides = [1, 1]} : vector<128x64xbf16> to vector<64x32xbf16>
    %cst_20 = arith.constant dense<0.000000e+00> : vector<16x32xf32>
    %52 = tpu.matmul %50, %51, %cst_20 {dimension_numbers = #tpu.dot_dimension_numbers<[1], [0], [0], [1], [0, 0, 1, 1], [], []>} : vector<16x64xbf16>, vector<64x32xbf16>, vector<16x32xf32> -> vector<16x32xf32>
    %53 = tpu.concatenate %49, %52 in 1 : vector<16x32xf32>, vector<16x32xf32> -> vector<16x64xf32>
    %54 = tpu.concatenate %46, %53 in 0 : vector<16x64xf32>, vector<16x64xf32> -> vector<32x64xf32>
    %cst_21 = arith.constant 3.000000e+00 : f32
    %55 = vector.broadcast %cst_21 : f32 to vector<32x64xf32>
    %56 = arith.addf %54, %55 : vector<32x64xf32>
    %cst_22 = arith.constant 0.000000e+00 : f32
    %cst_23 = arith.constant 6.000000e+00 : f32
    %57 = vector.broadcast %cst_22 : f32 to vector<32x64xf32>
    %58 = arith.maximumf %57, %56 : vector<32x64xf32>
    %59 = vector.broadcast %cst_23 : f32 to vector<32x64xf32>
    %60 = arith.minimumf %59, %58 : vector<32x64xf32>
    %61 = arith.mulf %54, %60 : vector<32x64xf32>
    %62 = arith.truncf %61 : vector<32x64xf32> to vector<32x64xbf16>
    %c0_24 = arith.constant 0 : index
    %c0_25 = arith.constant 0 : index
    %63 = vector.load %arg5[%c0_24, %c0_25] : memref<64x32xbf16, #tpu.memory_space<vmem>>, vector<64x32xbf16>
    %cst_26 = arith.constant dense<0.000000e+00> : vector<32x32xf32>
    %64 = tpu.matmul %62, %63, %cst_26 {dimension_numbers = #tpu.dot_dimension_numbers<[1], [0], [0], [1], [0, 0, 1, 1], [], []>} : vector<32x64xbf16>, vector<64x32xbf16>, vector<32x32xf32> -> vector<32x32xf32>
    %c0_27 = arith.constant 0 : index
    %c0_28 = arith.constant 0 : index
    %65 = vector.load %arg6[%c0_27, %c0_28] : memref<1x32xf32, #tpu.memory_space<vmem>>, vector<1x32xf32>
    %66 = vector.broadcast %65 : vector<1x32xf32> to vector<32x32xf32>
    %67 = arith.addf %64, %66 : vector<32x32xf32>
    %68 = vector.shape_cast %67 : vector<32x32xf32> to vector<2x16x32xf32>
    %c0_29 = arith.constant 0 : index
    %c0_30 = arith.constant 0 : index
    %c0_31 = arith.constant 0 : index
    %69 = vector.load %arg7[%c0_29, %c0_30, %c0_31] : memref<2x16x32xf32, #tpu.memory_space<vmem>>, vector<2x16x32xf32>
    tpu.vector_store %arg7[%c0_29, %c0_30, %c0_31], %68 {strides = array<i32>} : memref<2x16x32xf32, #tpu.memory_space<vmem>>, vector<2x16x32xf32>,
    return
  }
}

</mosaic_0001>

<llo_original>
// kernel: tpu_custom_call.1
$region0: #{tpu_custom_call.1}
  #allocation0 [shape = 'u32[]', space=smem, size = 0x4, offset = 0x4, fixed_abs, tag = 'smem constant byte address 0x4 - core index']
  #allocation1 [shape = 'u32[144,128]{1,0:T(1,128)}', space=vmem, size = 0x12000, scoped, tag = 'internal scratch']
  %s0 = inlined_call_operand.vmem [shape: f32[2,64,32], index: 0, kind: input, shape index: {}]
  %s1 = inlined_call_operand.vmem [shape: bf16[32,128], index: 1, kind: input, shape index: {}]
  %s2 = inlined_call_operand.vmem [shape: f32[1,128], index: 2, kind: input, shape index: {}]
  %s3 = inlined_call_operand.vmem [shape: bf16[32,128], index: 3, kind: input, shape index: {}]
  %s4 = inlined_call_operand.vmem [shape: f32[64,64], index: 4, kind: input, shape index: {}]
  %s5 = inlined_call_operand.vmem [shape: bf16[64,32], index: 5, kind: input, shape index: {}]
  %s6 = inlined_call_operand.vmem [shape: f32[1,32], index: 6, kind: input, shape index: {}]
  %s7 = inlined_call_operand.hbm [shape: f32[2,16,32], index: 7, kind: output, shape index: {}]
  %s8 = sld [smem:[#allocation0]]
  $region38: #{tpu_custom_call.1} parent=0
    _
  %s10 = ssub.s32 1, %s8
  %s11 = scalar_select 0, %s10, %s8
  $region1: #{tpu_custom_call.1} parent=0
    #allocation2 [shape = 'u8[16384]{0}', space=vmem, size = 0x4000, scoped, tag = 'output window, operand 0, single buffered']
    #allocation3 [shape = 's32[1]{0}', space=sflag, size = 0x4, scoped, tag = 'scoped memory for tpu_custom_call.1']
    %12 = vsyncpa [#allocation3], 0
    // Predicated region
    $region2: #{tpu_custom_call.1} parent=1 // pred_check
      _
    $region3: #{tpu_custom_call.1} parent=1 // pred_check_branch
      %14 = sbr.rel (0) target = $region5
    $region4: #{tpu_custom_call.1} parent=1 // pred_region
      _
    $region5: #{tpu_custom_call.1} parent=1 // pred_fallthru
      _
    // Predicated region
    $region6: #{tpu_custom_call.1} parent=1 // pred_check
      _
    $region7: #{tpu_custom_call.1} parent=1 // pred_check_branch
      %16 = sbr.rel (0) target = $region9
    $region8: #{tpu_custom_call.1} parent=1 // pred_region
      _
    $region9: #{tpu_custom_call.1} parent=1 // pred_fallthru
      _
    // Predicated region
    $region10: #{tpu_custom_call.1} parent=1 // pred_check
      _
    $region11: #{tpu_custom_call.1} parent=1 // pred_check_branch
      %18 = sbr.rel (0) target = $region13
    $region12: #{tpu_custom_call.1} parent=1 // pred_region
      _
    $region13: #{tpu_custom_call.1} parent=1 // pred_fallthru
      _
    // Predicated region
    $region14: #{tpu_custom_call.1} parent=1 // pred_check
      _
    $region15: #{tpu_custom_call.1} parent=1 // pred_check_branch
      %20 = sbr.rel (0) target = $region17
    $region16: #{tpu_custom_call.1} parent=1 // pred_region
      _
    $region17: #{tpu_custom_call.1} parent=1 // pred_fallthru
      _
    // Predicated region
    $region18: #{tpu_custom_call.1} parent=1 // pred_check
      _
    $region19: #{tpu_custom_call.1} parent=1 // pred_check_branch
      %22 = sbr.rel (0) target = $region21
    $region20: #{tpu_custom_call.1} parent=1 // pred_region
      _
    $region21: #{tpu_custom_call.1} parent=1 // pred_fallthru
      _
    // Predicated region
    $region22: #{tpu_custom_call.1} parent=1 // pred_check
      _
    $region23: #{tpu_custom_call.1} parent=1 // pred_check_branch
      %24 = sbr.rel (0) target = $region25
    $region24: #{tpu_custom_call.1} parent=1 // pred_region
      _
    $region25: #{tpu_custom_call.1} parent=1 // pred_fallthru
      _
    // Predicated region
    $region26: #{tpu_custom_call.1} parent=1 // pred_check
      _
    $region27: #{tpu_custom_call.1} parent=1 // pred_check_branch
      %26 = sbr.rel (0) target = $region29
    $region28: #{tpu_custom_call.1} parent=1 // pred_region
      _
    $region29: #{tpu_custom_call.1} parent=1 // pred_fallthru
      _
    %v28 = vld [vmem:[%s0] sm:$0xff]
    %v29 = vld [vmem:[%s0 + $0x8] sm:$0xff]
    %v30 = vld [vmem:[%s0 + $0x10] sm:$0xff]
    %v31 = vld [vmem:[%s0 + $0x18] sm:$0xff]
    %v32 = vld [vmem:[%s0 + $0x20] sm:$0xff]
    %v33 = vld [vmem:[%s0 + $0x28] sm:$0xff]
    %v34 = vld [vmem:[%s0 + $0x30] sm:$0xff]
    %v35 = vld [vmem:[%s0 + $0x38] sm:$0xff]
    %v36 = vld [vmem:[%s0 + $0x40] sm:$0xff]
    %v37 = vld [vmem:[%s0 + $0x48] sm:$0xff]
    %v38 = vld [vmem:[%s0 + $0x50] sm:$0xff]
    %v39 = vld [vmem:[%s0 + $0x58] sm:$0xff]
    %v40 = vld [vmem:[%s0 + $0x60] sm:$0xff]
    %v41 = vld [vmem:[%s0 + $0x68] sm:$0xff]
    %v42 = vld [vmem:[%s0 + $0x70] sm:$0xff]
    %v43 = vld [vmem:[%s0 + $0x78] sm:$0xff]
    %v44 = vpack.c.bf16 %v29, %v28
    %v45 = vpack.c.bf16 %v31, %v30
    %v46 = vpack.c.bf16 %v33, %v32
    %v47 = vpack.c.bf16 %v35, %v34
    %v48 = vpack.c.bf16 %v37, %v36
    %v49 = vpack.c.bf16 %v39, %v38
    %v50 = vpack.c.bf16 %v41, %v40
    %v51 = vpack.c.bf16 %v43, %v42
    %v52 = vld [vmem:[%s1] sm:$0xf]
    %v53 = vld [vmem:[%s1 + $0x4] sm:$0xf]
    %v54 = vld [vmem:[%s1 + $0x8] sm:$0xf]
    %v55 = vld [vmem:[%s1 + $0xc] sm:$0xf]
    %v56 = vld [vmem:[%s2] sm:$0x1]
    %v58 = vlaneseq
    %v59 = vshrl.u32 %v58, 7
    %v60 = vsub.s32 0, %v59
    %v61 = vrot.slane %v56, %v60
    %v67 = vunpack.c.l.b16 %v52
    %v68 = vunpack.c.l.b16 %v53
    %v69 = vunpack.c.l.b16 %v54
    %v70 = vunpack.c.l.b16 %v55
    %v71 = vpack.c.b16 %v68, %v67
    %v72 = vpack.c.b16 %v70, %v69
    %vm75 = vcmask 261120
    %v77 = vsel %vm75, %v44, 0
    %v80 = vsel %vm75, %v45, 0
    %v83 = vsel %vm75, %v46, 0
    %v86 = vsel %vm75, %v47, 0
    %v89 = vsel %vm75, %v48, 0
    %v92 = vsel %vm75, %v49, 0
    %v95 = vsel %vm75, %v50, 0
    %v98 = vsel %vm75, %v51, 0
    %100 = vmatprep.subr.bf16.mxu0 0
    %101 = vmatpush1.bf16.msra.mxu0 %v71
    %102 = vmatprep.subr.bf16.mxu0 0
    %103 = vmatpush1.bf16.msra.mxu0 %v72
    %104 = vmatprep.subr.bf16.mxu0 0
    %105 = vmatpush1.bf16.msra.mxu0 0
    %106 = vmatprep.subr.bf16.mxu0 0
    %107 = vmatpush1.bf16.msra.mxu0 0
    %108 = vmatprep.subr.bf16.mxu0 0
    %109 = vmatpush1.bf16.msra.mxu0 0
    %110 = vmatprep.subr.bf16.mxu0 0
    %111 = vmatpush1.bf16.msra.mxu0 0
    %112 = vmatprep.subr.bf16.mxu0 0
    %113 = vmatpush1.bf16.msra.mxu0 0
    %114 = vmatprep.subr.bf16.mxu0 0
    %115 = vmatpush1.bf16.msra.mxu0 0
    %116 = vmatprep.subr.bf16.mxu0 0
    %117 = vmatpush1.bf16.msra.mxu0 0
    %118 = vmatprep.subr.bf16.mxu0 0
    %119 = vmatpush1.bf16.msra.mxu0 0
    %120 = vmatprep.subr.bf16.mxu0 0
    %121 = vmatpush1.bf16.msra.mxu0 0
    %122 = vmatprep.subr.bf16.mxu0 0
    %123 = vmatpush1.bf16.msra.mxu0 0
    %124 = vmatprep.subr.bf16.mxu0 0
    %125 = vmatpush1.bf16.msra.mxu0 0
    %126 = vmatprep.subr.bf16.mxu0 0
    %127 = vmatpush1.bf16.msra.mxu0 0
    %128 = vmatprep.subr.bf16.mxu0 0
    %129 = vmatpush1.bf16.msra.mxu0 0
    %130 = vmatprep.subr.bf16.mxu0 0
    %131 = vmatpush1.bf16.msra.mxu0 0
    %132 = vmatprep.mubr.bf16.mxu0 0
    %133 = vmatmul.mubr.bf16.gmra.mrb[0].mxu0 %v77
    %v134 = vpop.f32.mrb[0].mxu0
    %v135 = vadd.f32 %v61, %v134
    %v136 = vpop.f32.mrb[0].mxu0
    %v137 = vpop.f32.mrb[0].mxu0
    %v138 = vadd.f32 %v61, %v137
    %v139 = vpop.f32.mrb[0].mxu0
    %140 = vmatprep.mubr.bf16.mxu0 0
    %141 = vmatmul.mubr.bf16.gmra.mrb[0].mxu0 %v80
    %v142 = vpop.f32.mrb[0].mxu0
    %v143 = vadd.f32 %v61, %v142
    %v144 = vpop.f32.mrb[0].mxu0
    %v145 = vpop.f32.mrb[0].mxu0
    %v146 = vadd.f32 %v61, %v145
    %v147 = vpop.f32.mrb[0].mxu0
    %148 = vmatprep.mubr.bf16.mxu0 0
    %149 = vmatmul.mubr.bf16.gmra.mrb[0].mxu0 %v83
    %v150 = vpop.f32.mrb[0].mxu0
    %v151 = vadd.f32 %v61, %v150
    %v152 = vpop.f32.mrb[0].mxu0
    %v153 = vpop.f32.mrb[0].mxu0
    %v154 = vadd.f32 %v61, %v153
    %v155 = vpop.f32.mrb[0].mxu0
    %156 = vmatprep.mubr.bf16.mxu0 0
    %157 = vmatmul.mubr.bf16.gmra.mrb[0].mxu0 %v86
    %v158 = vpop.f32.mrb[0].mxu0
    %v159 = vadd.f32 %v61, %v158
    %v160 = vpop.f32.mrb[0].mxu0
    %v161 = vpop.f32.mrb[0].mxu0
    %v162 = vadd.f32 %v61, %v161
    %v163 = vpop.f32.mrb[0].mxu0
    %164 = vmatprep.mubr.bf16.mxu0 0
    %165 = vmatmul.mubr.bf16.gmra.mrb[0].mxu0 %v89
    %v166 = vpop.f32.mrb[0].mxu0
    %v167 = vadd.f32 %v61, %v166
    %v168 = vpop.f32.mrb[0].mxu0
    %v169 = vpop.f32.mrb[0].mxu0
    %v170 = vadd.f32 %v61, %v169
    %v171 = vpop.f32.mrb[0].mxu0
    %172 = vmatprep.mubr.bf16.mxu0 0
    %173 = vmatmul.mubr.bf16.gmra.mrb[0].mxu0 %v92
    %v174 = vpop.f32.mrb[0].mxu0
    %v175 = vadd.f32 %v61, %v174
    %v176 = vpop.f32.mrb[0].mxu0
    %v177 = vpop.f32.mrb[0].mxu0
    %v178 = vadd.f32 %v61, %v177
    %v179 = vpop.f32.mrb[0].mxu0
    %180 = vmatprep.mubr.bf16.mxu0 0
    %181 = vmatmul.mubr.bf16.gmra.mrb[0].mxu0 %v95
    %v182 = vpop.f32.mrb[0].mxu0
    %v183 = vadd.f32 %v61, %v182
    %v184 = vpop.f32.mrb[0].mxu0
    %v185 = vpop.f32.mrb[0].mxu0
    %v186 = vadd.f32 %v61, %v185
    %v187 = vpop.f32.mrb[0].mxu0
    %188 = vmatprep.mubr.bf16.mxu0 0
    %189 = vmatmul.mubr.bf16.gmra.mrb[0].mxu0 %v98
    %v190 = vpop.f32.mrb[0].mxu0
    %v191 = vadd.f32 %v61, %v190
    %v192 = vpop.f32.mrb[0].mxu0
    %v193 = vpop.f32.mrb[0].mxu0
    %v194 = vadd.f32 %v61, %v193
    %v195 = vpop.f32.mrb[0].mxu0
    %196 = vdwg.mxu0
    %v197 = vpack.c.bf16 %v138, %v135
    %v198 = vpack.c.bf16 %v146, %v143
    %v199 = vpack.c.bf16 %v154, %v151
    %v200 = vpack.c.bf16 %v162, %v159
    %v201 = vpack.c.bf16 %v170, %v167
    %v202 = vpack.c.bf16 %v178, %v175
    %v203 = vpack.c.bf16 %v186, %v183
    %v204 = vpack.c.bf16 %v194, %v191
    %v205 = vld [vmem:[%s3] sm:$0xf]
    %v206 = vld [vmem:[%s3 + $0x4] sm:$0xf]
    %v207 = vld [vmem:[%s3 + $0x8] sm:$0xf]
    %v208 = vld [vmem:[%s3 + $0xc] sm:$0xf]
    %v213 = vunpack.c.l.b16 %v205
    %v214 = vunpack.c.l.b16 %v206
    %v215 = vunpack.c.l.b16 %v207
    %v216 = vunpack.c.l.b16 %v208
    %v217 = vpack.c.b16 %v214, %v213
    %v218 = vpack.c.b16 %v216, %v215
    %221 = vmatprep.subr.bf16.mxu0 0
    %222 = vmatpush1.bf16.msra.mxu0 %v197
    %223 = vmatprep.subr.bf16.mxu0 0
    %224 = vmatpush1.bf16.msra.mxu0 %v198
    %225 = vmatprep.subr.bf16.mxu0 0
    %226 = vmatpush1.bf16.msra.mxu0 %v199
    %227 = vmatprep.subr.bf16.mxu0 0
    %228 = vmatpush1.bf16.msra.mxu0 %v200
    %229 = vmatprep.subr.bf16.mxu0 0
    %230 = vmatpush1.bf16.msra.mxu0 %v201
    %231 = vmatprep.subr.bf16.mxu0 0
    %232 = vmatpush1.bf16.msra.mxu0 %v202
    %233 = vmatprep.subr.bf16.mxu0 0
    %234 = vmatpush1.bf16.msra.mxu0 %v203
    %235 = vmatprep.subr.bf16.mxu0 0
    %236 = vmatpush1.bf16.msra.mxu0 %v204
    %237 = vmatprep.subr.bf16.mxu0 0
    %238 = vmatpush1.bf16.msra.mxu0 0
    %239 = vmatprep.subr.bf16.mxu0 0
    %240 = vmatpush1.bf16.msra.mxu0 0
    %241 = vmatprep.subr.bf16.mxu0 0
    %242 = vmatpush1.bf16.msra.mxu0 0
    %243 = vmatprep.subr.bf16.mxu0 0
    %244 = vmatpush1.bf16.msra.mxu0 0
    %245 = vmatprep.subr.bf16.mxu0 0
    %246 = vmatpush1.bf16.msra.mxu0 0
    %247 = vmatprep.subr.bf16.mxu0 0
    %248 = vmatpush1.bf16.msra.mxu0 0
    %249 = vmatprep.subr.bf16.mxu0 0
    %250 = vmatpush1.bf16.msra.mxu0 0
    %251 = vmatprep.subr.bf16.mxu0 0
    %252 = vmatpush1.bf16.msra.mxu0 0
    %253 = vmatprep.mubr.bf16.mxu0 0
    %254 = vmatmul.mubr.bf16.gmra.mrb[0].mxu0 %v217
    %v255 = vpop.f32.mrb[0].mxu0
    %v256 = vadd.f32 0.0, %v255
    %v257 = vpop.f32.mrb[0].mxu0
    %v258 = vpop.f32.mrb[0].mxu0
    %v259 = vadd.f32 0.0, %v258
    %v260 = vpop.f32.mrb[0].mxu0
    %261 = vmatprep.mubr.bf16.mxu0 0
    %262 = vmatmul.mubr.bf16.gmra.mrb[0].mxu0 %v218
    %v263 = vpop.f32.mrb[0].mxu0
    %v264 = vadd.f32 0.0, %v263
    %v265 = vpop.f32.mrb[0].mxu0
    %v266 = vpop.f32.mrb[0].mxu0
    %v267 = vadd.f32 0.0, %v266
    %v268 = vpop.f32.mrb[0].mxu0
    %269 = vdwg.mxu0
    %v270 = vpack.c.bf16 %v259, %v256
    %v271 = vpack.c.bf16 %v267, %v264
    %276 = vrot.lane.b32.xlu0 %v197, 96
    %v277 = vpop.permute.xlu0 %276
    %278 = vrot.lane.b32.xlu0 %v198, 96
    %v279 = vpop.permute.xlu0 %278
    %280 = vrot.lane.b32.xlu0 %v199, 96
    %v281 = vpop.permute.xlu0 %280
    %282 = vrot.lane.b32.xlu0 %v200, 96
    %v283 = vpop.permute.xlu0 %282
    %vm284 = vcmask 130048
    %v286 = vsel %vm284, %v270, 0
    %v289 = vsel %vm284, %v277, 0
    %v292 = vsel %vm284, %v279, 0
    %v295 = vsel %vm284, %v281, 0
    %v298 = vsel %vm284, %v283, 0
    %300 = vmatprep.subr.bf16.mxu0 0
    %301 = vmatpush1.bf16.xpose.msra.mxu0 %v289
    %302 = vmatprep.subr.bf16.mxu0 0
    %303 = vmatpush1.bf16.xpose.msra.mxu0 %v292
    %304 = vmatprep.subr.bf16.mxu0 0
    %305 = vmatpush1.bf16.xpose.msra.mxu0 %v295
    %306 = vmatprep.subr.bf16.mxu0 0
    %307 = vmatpush1.bf16.xpose.msra.mxu0 %v298
    %308 = vmatprep.subr.bf16.mxu0 0
    %309 = vmatpush1.bf16.xpose.msra.mxu0 0
    %310 = vmatprep.subr.bf16.mxu0 0
    %311 = vmatpush1.bf16.xpose.msra.mxu0 0
    %312 = vmatprep.subr.bf16.mxu0 0
    %313 = vmatpush1.bf16.xpose.msra.mxu0 0
    %314 = vmatprep.subr.bf16.mxu0 0
    %315 = vmatpush1.bf16.xpose.msra.mxu0 0
    %316 = vmatprep.subr.bf16.mxu0 0
    %317 = vmatpush1.bf16.xpose.msra.mxu0 0
    %318 = vmatprep.subr.bf16.mxu0 0
    %319 = vmatpush1.bf16.xpose.msra.mxu0 0
    %320 = vmatprep.subr.bf16.mxu0 0
    %321 = vmatpush1.bf16.xpose.msra.mxu0 0
    %322 = vmatprep.subr.bf16.mxu0 0
    %323 = vmatpush1.bf16.xpose.msra.mxu0 0
    %324 = vmatprep.subr.bf16.mxu0 0
    %325 = vmatpush1.bf16.xpose.msra.mxu0 0
    %326 = vmatprep.subr.bf16.mxu0 0
    %327 = vmatpush1.bf16.xpose.msra.mxu0 0
    %328 = vmatprep.subr.bf16.mxu0 0
    %329 = vmatpush1.bf16.xpose.msra.mxu0 0
    %330 = vmatprep.subr.bf16.mxu0 0
    %331 = vmatpush1.bf16.xpose.msra.mxu0 0
    %332 = vmatprep.mubr.bf16.mxu0 0
    %333 = vmatmul.mubr.bf16.gmra.mrb[0].mxu0 %v286
    %v334 = vpop.f32.mrb[0].mxu0
    %v335 = vadd.f32 0.0, %v334
    %v336 = vpop.f32.mrb[0].mxu0
    %v337 = vpop.f32.mrb[0].mxu0
    %v338 = vadd.f32 0.0, %v337
    %v339 = vpop.f32.mrb[0].mxu0
    %340 = vdwg.mxu0
    %342 = vrot.lane.b32.xlu0 %v270, 112
    %v343 = vpop.permute.xlu0 %342
    %344 = vrot.lane.b32.xlu0 %v197, 80
    %v345 = vpop.permute.xlu0 %344
    %346 = vrot.lane.b32.xlu0 %v198, 80
    %v347 = vpop.permute.xlu0 %346
    %348 = vrot.lane.b32.xlu0 %v199, 80
    %v349 = vpop.permute.xlu0 %348
    %350 = vrot.lane.b32.xlu0 %v200, 80
    %v351 = vpop.permute.xlu0 %350
    %v353 = vsel %vm284, %v343, 0
    %v356 = vsel %vm284, %v345, 0
    %v359 = vsel %vm284, %v347, 0
    %v362 = vsel %vm284, %v349, 0
    %v365 = vsel %vm284, %v351, 0
    %367 = vmatprep.subr.bf16.mxu0 0
    %368 = vmatpush1.bf16.xpose.msra.mxu0 %v356
    %369 = vmatprep.subr.bf16.mxu0 0
    %370 = vmatpush1.bf16.xpose.msra.mxu0 %v359
    %371 = vmatprep.subr.bf16.mxu0 0
    %372 = vmatpush1.bf16.xpose.msra.mxu0 %v362
    %373 = vmatprep.subr.bf16.mxu0 0
    %374 = vmatpush1.bf16.xpose.msra.mxu0 %v365
    %375 = vmatprep.subr.bf16.mxu0 0
    %376 = vmatpush1.bf16.xpose.msra.mxu0 0
    %377 = vmatprep.subr.bf16.mxu0 0
    %378 = vmatpush1.bf16.xpose.msra.mxu0 0
    %379 = vmatprep.subr.bf16.mxu0 0
    %380 = vmatpush1.bf16.xpose.msra.mxu0 0
    %381 = vmatprep.subr.bf16.mxu0 0
    %382 = vmatpush1.bf16.xpose.msra.mxu0 0
    %383 = vmatprep.subr.bf16.mxu0 0
    %384 = vmatpush1.bf16.xpose.msra.mxu0 0
    %385 = vmatprep.subr.bf16.mxu0 0
    %386 = vmatpush1.bf16.xpose.msra.mxu0 0
    %387 = vmatprep.subr.bf16.mxu0 0
    %388 = vmatpush1.bf16.xpose.msra.mxu0 0
    %389 = vmatprep.subr.bf16.mxu0 0
    %390 = vmatpush1.bf16.xpose.msra.mxu0 0
    %391 = vmatprep.subr.bf16.mxu0 0
    %392 = vmatpush1.bf16.xpose.msra.mxu0 0
    %393 = vmatprep.subr.bf16.mxu0 0
    %394 = vmatpush1.bf16.xpose.msra.mxu0 0
    %395 = vmatprep.subr.bf16.mxu0 0
    %396 = vmatpush1.bf16.xpose.msra.mxu0 0
    %397 = vmatprep.subr.bf16.mxu0 0
    %398 = vmatpush1.bf16.xpose.msra.mxu0 0
    %399 = vmatprep.mubr.bf16.mxu0 0
    %400 = vmatmul.mubr.bf16.gmra.mrb[0].mxu0 %v353
    %v401 = vpop.f32.mrb[0].mxu0
    %v402 = vadd.f32 0.0, %v401
    %v403 = vpop.f32.mrb[0].mxu0
    %v404 = vpop.f32.mrb[0].mxu0
    %v405 = vadd.f32 0.0, %v404
    %v406 = vpop.f32.mrb[0].mxu0
    %407 = vdwg.mxu0
    %412 = vrot.lane.b32.xlu0 %v201, 96
    %v413 = vpop.permute.xlu0 %412
    %414 = vrot.lane.b32.xlu0 %v202, 96
    %v415 = vpop.permute.xlu0 %414
    %416 = vrot.lane.b32.xlu0 %v203, 96
    %v417 = vpop.permute.xlu0 %416
    %418 = vrot.lane.b32.xlu0 %v204, 96
    %v419 = vpop.permute.xlu0 %418
    %v421 = vsel %vm284, %v271, 0
    %v424 = vsel %vm284, %v413, 0
    %v427 = vsel %vm284, %v415, 0
    %v430 = vsel %vm284, %v417, 0
    %v433 = vsel %vm284, %v419, 0
    %435 = vmatprep.subr.bf16.mxu0 0
    %436 = vmatpush1.bf16.xpose.msra.mxu0 %v424
    %437 = vmatprep.subr.bf16.mxu0 0
    %438 = vmatpush1.bf16.xpose.msra.mxu0 %v427
    %439 = vmatprep.subr.bf16.mxu0 0
    %440 = vmatpush1.bf16.xpose.msra.mxu0 %v430
    %441 = vmatprep.subr.bf16.mxu0 0
    %442 = vmatpush1.bf16.xpose.msra.mxu0 %v433
    %443 = vmatprep.subr.bf16.mxu0 0
    %444 = vmatpush1.bf16.xpose.msra.mxu0 0
    %445 = vmatprep.subr.bf16.mxu0 0
    %446 = vmatpush1.bf16.xpose.msra.mxu0 0
    %447 = vmatprep.subr.bf16.mxu0 0
    %448 = vmatpush1.bf16.xpose.msra.mxu0 0
    %449 = vmatprep.subr.bf16.mxu0 0
    %450 = vmatpush1.bf16.xpose.msra.mxu0 0
    %451 = vmatprep.subr.bf16.mxu0 0
    %452 = vmatpush1.bf16.xpose.msra.mxu0 0
    %453 = vmatprep.subr.bf16.mxu0 0
    %454 = vmatpush1.bf16.xpose.msra.mxu0 0
    %455 = vmatprep.subr.bf16.mxu0 0
    %456 = vmatpush1.bf16.xpose.msra.mxu0 0
    %457 = vmatprep.subr.bf16.mxu0 0
    %458 = vmatpush1.bf16.xpose.msra.mxu0 0
    %459 = vmatprep.subr.bf16.mxu0 0
    %460 = vmatpush1.bf16.xpose.msra.mxu0 0
    %461 = vmatprep.subr.bf16.mxu0 0
    %462 = vmatpush1.bf16.xpose.msra.mxu0 0
    %463 = vmatprep.subr.bf16.mxu0 0
    %464 = vmatpush1.bf16.xpose.msra.mxu0 0
    %465 = vmatprep.subr.bf16.mxu0 0
    %466 = vmatpush1.bf16.xpose.msra.mxu0 0
    %467 = vmatprep.mubr.bf16.mxu0 0
    %468 = vmatmul.mubr.bf16.gmra.mrb[0].mxu0 %v421
    %v469 = vpop.f32.mrb[0].mxu0
    %v470 = vadd.f32 0.0, %v469
    %v471 = vpop.f32.mrb[0].mxu0
    %v472 = vpop.f32.mrb[0].mxu0
    %v473 = vadd.f32 0.0, %v472
    %v474 = vpop.f32.mrb[0].mxu0
    %475 = vdwg.mxu0
    %477 = vrot.lane.b32.xlu0 %v271, 112
    %v478 = vpop.permute.xlu0 %477
    %479 = vrot.lane.b32.xlu0 %v201, 80
    %v480 = vpop.permute.xlu0 %479
    %481 = vrot.lane.b32.xlu0 %v202, 80
    %v482 = vpop.permute.xlu0 %481
    %483 = vrot.lane.b32.xlu0 %v203, 80
    %v484 = vpop.permute.xlu0 %483
    %485 = vrot.lane.b32.xlu0 %v204, 80
    %v486 = vpop.permute.xlu0 %485
    %v488 = vsel %vm284, %v478, 0
    %v491 = vsel %vm284, %v480, 0
    %v494 = vsel %vm284, %v482, 0
    %v497 = vsel %vm284, %v484, 0
    %v500 = vsel %vm284, %v486, 0
    %502 = vmatprep.subr.bf16.mxu0 0
    %503 = vmatpush1.bf16.xpose.msra.mxu0 %v491
    %504 = vmatprep.subr.bf16.mxu0 0
    %505 = vmatpush1.bf16.xpose.msra.mxu0 %v494
    %506 = vmatprep.subr.bf16.mxu0 0
    %507 = vmatpush1.bf16.xpose.msra.mxu0 %v497
    %508 = vmatprep.subr.bf16.mxu0 0
    %509 = vmatpush1.bf16.xpose.msra.mxu0 %v500
    %510 = vmatprep.subr.bf16.mxu0 0
    %511 = vmatpush1.bf16.xpose.msra.mxu0 0
    %512 = vmatprep.subr.bf16.mxu0 0
    %513 = vmatpush1.bf16.xpose.msra.mxu0 0
    %514 = vmatprep.subr.bf16.mxu0 0
    %515 = vmatpush1.bf16.xpose.msra.mxu0 0
    %516 = vmatprep.subr.bf16.mxu0 0
    %517 = vmatpush1.bf16.xpose.msra.mxu0 0
    %518 = vmatprep.subr.bf16.mxu0 0
    %519 = vmatpush1.bf16.xpose.msra.mxu0 0
    %520 = vmatprep.subr.bf16.mxu0 0
    %521 = vmatpush1.bf16.xpose.msra.mxu0 0
    %522 = vmatprep.subr.bf16.mxu0 0
    %523 = vmatpush1.bf16.xpose.msra.mxu0 0
    %524 = vmatprep.subr.bf16.mxu0 0
    %525 = vmatpush1.bf16.xpose.msra.mxu0 0
    %526 = vmatprep.subr.bf16.mxu0 0
    %527 = vmatpush1.bf16.xpose.msra.mxu0 0
    %528 = vmatprep.subr.bf16.mxu0 0
    %529 = vmatpush1.bf16.xpose.msra.mxu0 0
    %530 = vmatprep.subr.bf16.mxu0 0
    %531 = vmatpush1.bf16.xpose.msra.mxu0 0
    %532 = vmatprep.subr.bf16.mxu0 0
    %533 = vmatpush1.bf16.xpose.msra.mxu0 0
    %534 = vmatprep.mubr.bf16.mxu0 0
    %535 = vmatmul.mubr.bf16.gmra.mrb[0].mxu0 %v488
    %v536 = vpop.f32.mrb[0].mxu0
    %v537 = vadd.f32 0.0, %v536
    %v538 = vpop.f32.mrb[0].mxu0
    %v539 = vpop.f32.mrb[0].mxu0
    %v540 = vadd.f32 0.0, %v539
    %v541 = vpop.f32.mrb[0].mxu0
    %542 = vdwg.mxu0
    %v543 = vld [vmem:[%s4] sm:$0xff]
    %v544 = vld [vmem:[%s4 + $0x8] sm:$0xff]
    %v545 = vld [vmem:[%s4 + $0x10] sm:$0xff]
    %v546 = vld [vmem:[%s4 + $0x18] sm:$0xff]
    %v547 = vld [vmem:[%s4 + $0x20] sm:$0xff]
    %v548 = vld [vmem:[%s4 + $0x28] sm:$0xff]
    %v549 = vld [vmem:[%s4 + $0x30] sm:$0xff]
    %v550 = vld [vmem:[%s4 + $0x38] sm:$0xff]
    %v551 = vadd.f32 %v335, %v543
    %v552 = vadd.f32 %v338, %v544
    %v553 = vadd.f32 %v402, %v545
    %v554 = vadd.f32 %v405, %v546
    %v555 = vadd.f32 %v470, %v547
    %v556 = vadd.f32 %v473, %v548
    %v557 = vadd.f32 %v537, %v549
    %v558 = vadd.f32 %v540, %v550
    %vm559 = vcmask 523264
    %v560 = vsel %vm559, %v551, -inf
    %561 = vmax.xlane.f32.xlu0 %v560
    %v562 = vpop.xlane.xlu0 %561
    %v563 = vsel %vm559, %v552, -inf
    %564 = vmax.xlane.f32.xlu0 %v563
    %v565 = vpop.xlane.xlu0 %564
    %v566 = vsel %vm559, %v553, -inf
    %567 = vmax.xlane.f32.xlu0 %v566
    %v568 = vpop.xlane.xlu0 %567
    %v569 = vsel %vm559, %v554, -inf
    %570 = vmax.xlane.f32.xlu0 %v569
    %v571 = vpop.xlane.xlu0 %570
    %v572 = vsel %vm559, %v555, -inf
    %573 = vmax.xlane.f32.xlu0 %v572
    %v574 = vpop.xlane.xlu0 %573
    %v575 = vsel %vm559, %v556, -inf
    %576 = vmax.xlane.f32.xlu0 %v575
    %v577 = vpop.xlane.xlu0 %576
    %v578 = vsel %vm559, %v557, -inf
    %579 = vmax.xlane.f32.xlu0 %v578
    %v580 = vpop.xlane.xlu0 %579
    %v581 = vsel %vm559, %v558, -inf
    %582 = vmax.xlane.f32.xlu0 %v581
    %v583 = vpop.xlane.xlu0 %582
    %v584 = vsub.f32 %v551, %v562
    %v585 = vsub.f32 %v552, %v565
    %v586 = vsub.f32 %v553, %v568
    %v587 = vsub.f32 %v554, %v571
    %v588 = vsub.f32 %v555, %v574
    %v589 = vsub.f32 %v556, %v577
    %v590 = vsub.f32 %v557, %v580
    %v591 = vsub.f32 %v558, %v583
    %v592 = vmul.f32 %v584, 1.442695
    %v593 = vpow.pop %v592
    %v594 = vmul.f32 %v585, 1.442695
    %v595 = vpow.pop %v594
    %v596 = vmul.f32 %v586, 1.442695
    %v597 = vpow.pop %v596
    %v598 = vmul.f32 %v587, 1.442695
    %v599 = vpow.pop %v598
    %v600 = vmul.f32 %v588, 1.442695
    %v601 = vpow.pop %v600
    %v602 = vmul.f32 %v589, 1.442695
    %v603 = vpow.pop %v602
    %v604 = vmul.f32 %v590, 1.442695
    %v605 = vpow.pop %v604
    %v606 = vmul.f32 %v591, 1.442695
    %v607 = vpow.pop %v606
    %v608 = vsel %vm559, %v593, 0.0
    %609 = vadd.xlane.f32.xlu0 %v608
    %v610 = vpop.xlane.xlu0 %609
    %v611 = vsel %vm559, %v595, 0.0
    %612 = vadd.xlane.f32.xlu0 %v611
    %v613 = vpop.xlane.xlu0 %612
    %v614 = vsel %vm559, %v597, 0.0
    %615 = vadd.xlane.f32.xlu0 %v614
    %v616 = vpop.xlane.xlu0 %615
    %v617 = vsel %vm559, %v599, 0.0
    %618 = vadd.xlane.f32.xlu0 %v617
    %v619 = vpop.xlane.xlu0 %618
    %v620 = vsel %vm559, %v601, 0.0
    %621 = vadd.xlane.f32.xlu0 %v620
    %v622 = vpop.xlane.xlu0 %621
    %v623 = vsel %vm559, %v603, 0.0
    %624 = vadd.xlane.f32.xlu0 %v623
    %v625 = vpop.xlane.xlu0 %624
    %v626 = vsel %vm559, %v605, 0.0
    %627 = vadd.xlane.f32.xlu0 %v626
    %v628 = vpop.xlane.xlu0 %627
    %v629 = vsel %vm559, %v607, 0.0
    %630 = vadd.xlane.f32.xlu0 %v629
    %v631 = vpop.xlane.xlu0 %630
    %v632 = vrcp.pop %v610
    %v633 = vmul.f32 %v593, %v632
    %v634 = vrcp.pop %v613
    %v635 = vmul.f32 %v595, %v634
    %v636 = vrcp.pop %v616
    %v637 = vmul.f32 %v597, %v636
    %v638 = vrcp.pop %v619
    %v639 = vmul.f32 %v599, %v638
    %v640 = vrcp.pop %v622
    %v641 = vmul.f32 %v601, %v640
    %v642 = vrcp.pop %v625
    %v643 = vmul.f32 %v603, %v642
    %v644 = vrcp.pop %v628
    %v645 = vmul.f32 %v605, %v644
    %v646 = vrcp.pop %v631
    %v647 = vmul.f32 %v607, %v646
    %v648 = vpack.c.bf16 %v635, %v633
    %v649 = vpack.c.bf16 %v639, %v637
    %v650 = vpack.c.bf16 %v643, %v641
    %v651 = vpack.c.bf16 %v647, %v645
    %652 = vrot.lane.b32.xlu0 %v197, 64
    %v653 = vpop.permute.xlu0 %652
    %654 = vrot.lane.b32.xlu0 %v198, 64
    %v655 = vpop.permute.xlu0 %654
    %656 = vrot.lane.b32.xlu0 %v199, 64
    %v657 = vpop.permute.xlu0 %656
    %658 = vrot.lane.b32.xlu0 %v200, 64
    %v659 = vpop.permute.xlu0 %658
    %v665 = vsel %vm559, %v648, 0
    %667 = vmatprep.subr.bf16.mxu0 0
    %668 = vmatpush1.bf16.msra.mxu0 %v653
    %669 = vmatprep.subr.bf16.mxu0 0
    %670 = vmatpush1.bf16.msra.mxu0 %v655
    %671 = vmatprep.subr.bf16.mxu0 0
    %672 = vmatpush1.bf16.msra.mxu0 %v657
    %673 = vmatprep.subr.bf16.mxu0 0
    %674 = vmatpush1.bf16.msra.mxu0 %v659
    %675 = vmatprep.subr.bf16.mxu0 0
    %676 = vmatpush1.bf16.msra.mxu0 0
    %677 = vmatprep.subr.bf16.mxu0 0
    %678 = vmatpush1.bf16.msra.mxu0 0
    %679 = vmatprep.subr.bf16.mxu0 0
    %680 = vmatpush1.bf16.msra.mxu0 0
    %681 = vmatprep.subr.bf16.mxu0 0
    %682 = vmatpush1.bf16.msra.mxu0 0
    %683 = vmatprep.subr.bf16.mxu0 0
    %684 = vmatpush1.bf16.msra.mxu0 0
    %685 = vmatprep.subr.bf16.mxu0 0
    %686 = vmatpush1.bf16.msra.mxu0 0
    %687 = vmatprep.subr.bf16.mxu0 0
    %688 = vmatpush1.bf16.msra.mxu0 0
    %689 = vmatprep.subr.bf16.mxu0 0
    %690 = vmatpush1.bf16.msra.mxu0 0
    %691 = vmatprep.subr.bf16.mxu0 0
    %692 = vmatpush1.bf16.msra.mxu0 0
    %693 = vmatprep.subr.bf16.mxu0 0
    %694 = vmatpush1.bf16.msra.mxu0 0
    %695 = vmatprep.subr.bf16.mxu0 0
    %696 = vmatpush1.bf16.msra.mxu0 0
    %697 = vmatprep.subr.bf16.mxu0 0
    %698 = vmatpush1.bf16.msra.mxu0 0
    %699 = vmatprep.mubr.bf16.mxu0 0
    %700 = vmatmul.mubr.bf16.gmra.mrb[0].mxu0 %v665
    %v701 = vpop.f32.mrb[0].mxu0
    %v702 = vadd.f32 0.0, %v701
    %v703 = vpop.f32.mrb[0].mxu0
    %v704 = vpop.f32.mrb[0].mxu0
    %v705 = vadd.f32 0.0, %v704
    %v706 = vpop.f32.mrb[0].mxu0
    %707 = vdwg.mxu0
    %708 = vrot.lane.b32.xlu0 %v197, 32
    %v709 = vpop.permute.xlu0 %708
    %710 = vrot.lane.b32.xlu0 %v198, 32
    %v711 = vpop.permute.xlu0 %710
    %712 = vrot.lane.b32.xlu0 %v199, 32
    %v713 = vpop.permute.xlu0 %712
    %714 = vrot.lane.b32.xlu0 %v200, 32
    %v715 = vpop.permute.xlu0 %714
    %v721 = vsel %vm559, %v649, 0
    %723 = vmatprep.subr.bf16.mxu0 0
    %724 = vmatpush1.bf16.msra.mxu0 %v709
    %725 = vmatprep.subr.bf16.mxu0 0
    %726 = vmatpush1.bf16.msra.mxu0 %v711
    %727 = vmatprep.subr.bf16.mxu0 0
    %728 = vmatpush1.bf16.msra.mxu0 %v713
    %729 = vmatprep.subr.bf16.mxu0 0
    %730 = vmatpush1.bf16.msra.mxu0 %v715
    %731 = vmatprep.subr.bf16.mxu0 0
    %732 = vmatpush1.bf16.msra.mxu0 0
    %733 = vmatprep.subr.bf16.mxu0 0
    %734 = vmatpush1.bf16.msra.mxu0 0
    %735 = vmatprep.subr.bf16.mxu0 0
    %736 = vmatpush1.bf16.msra.mxu0 0
    %737 = vmatprep.subr.bf16.mxu0 0
    %738 = vmatpush1.bf16.msra.mxu0 0
    %739 = vmatprep.subr.bf16.mxu0 0
    %740 = vmatpush1.bf16.msra.mxu0 0
    %741 = vmatprep.subr.bf16.mxu0 0
    %742 = vmatpush1.bf16.msra.mxu0 0
    %743 = vmatprep.subr.bf16.mxu0 0
    %744 = vmatpush1.bf16.msra.mxu0 0
    %745 = vmatprep.subr.bf16.mxu0 0
    %746 = vmatpush1.bf16.msra.mxu0 0
    %747 = vmatprep.subr.bf16.mxu0 0
    %748 = vmatpush1.bf16.msra.mxu0 0
    %749 = vmatprep.subr.bf16.mxu0 0
    %750 = vmatpush1.bf16.msra.mxu0 0
    %751 = vmatprep.subr.bf16.mxu0 0
    %752 = vmatpush1.bf16.msra.mxu0 0
    %753 = vmatprep.subr.bf16.mxu0 0
    %754 = vmatpush1.bf16.msra.mxu0 0
    %755 = vmatprep.mubr.bf16.mxu0 0
    %756 = vmatmul.mubr.bf16.gmra.mrb[0].mxu0 %v721
    %v757 = vpop.f32.mrb[0].mxu0
    %v758 = vadd.f32 0.0, %v757
    %v759 = vpop.f32.mrb[0].mxu0
    %v760 = vpop.f32.mrb[0].mxu0
    %v761 = vadd.f32 0.0, %v760
    %v762 = vpop.f32.mrb[0].mxu0
    %763 = vdwg.mxu0
    %766 = vrot.lane.b32.xlu0 %v758, 32
    %v767 = vpop.permute.xlu0 %766
    %768 = vrot.lane.b32.xlu0 %v761, 32
    %v769 = vpop.permute.xlu0 %768
    %v772 = vsel %vm75, %v702, %v767
    %v773 = vsel %vm75, %v705, %v769
    %774 = vrot.lane.b32.xlu0 %v201, 64
    %v775 = vpop.permute.xlu0 %774
    %776 = vrot.lane.b32.xlu0 %v202, 64
    %v777 = vpop.permute.xlu0 %776
    %778 = vrot.lane.b32.xlu0 %v203, 64
    %v779 = vpop.permute.xlu0 %778
    %780 = vrot.lane.b32.xlu0 %v204, 64
    %v781 = vpop.permute.xlu0 %780
    %v787 = vsel %vm559, %v650, 0
    %789 = vmatprep.subr.bf16.mxu0 0
    %790 = vmatpush1.bf16.msra.mxu0 %v775
    %791 = vmatprep.subr.bf16.mxu0 0
    %792 = vmatpush1.bf16.msra.mxu0 %v777
    %793 = vmatprep.subr.bf16.mxu0 0
    %794 = vmatpush1.bf16.msra.mxu0 %v779
    %795 = vmatprep.subr.bf16.mxu0 0
    %796 = vmatpush1.bf16.msra.mxu0 %v781
    %797 = vmatprep.subr.bf16.mxu0 0
    %798 = vmatpush1.bf16.msra.mxu0 0
    %799 = vmatprep.subr.bf16.mxu0 0
    %800 = vmatpush1.bf16.msra.mxu0 0
    %801 = vmatprep.subr.bf16.mxu0 0
    %802 = vmatpush1.bf16.msra.mxu0 0
    %803 = vmatprep.subr.bf16.mxu0 0
    %804 = vmatpush1.bf16.msra.mxu0 0
    %805 = vmatprep.subr.bf16.mxu0 0
    %806 = vmatpush1.bf16.msra.mxu0 0
    %807 = vmatprep.subr.bf16.mxu0 0
    %808 = vmatpush1.bf16.msra.mxu0 0
    %809 = vmatprep.subr.bf16.mxu0 0
    %810 = vmatpush1.bf16.msra.mxu0 0
    %811 = vmatprep.subr.bf16.mxu0 0
    %812 = vmatpush1.bf16.msra.mxu0 0
    %813 = vmatprep.subr.bf16.mxu0 0
    %814 = vmatpush1.bf16.msra.mxu0 0
    %815 = vmatprep.subr.bf16.mxu0 0
    %816 = vmatpush1.bf16.msra.mxu0 0
    %817 = vmatprep.subr.bf16.mxu0 0
    %818 = vmatpush1.bf16.msra.mxu0 0
    %819 = vmatprep.subr.bf16.mxu0 0
    %820 = vmatpush1.bf16.msra.mxu0 0
    %821 = vmatprep.mubr.bf16.mxu0 0
    %822 = vmatmul.mubr.bf16.gmra.mrb[0].mxu0 %v787
    %v823 = vpop.f32.mrb[0].mxu0
    %v824 = vadd.f32 0.0, %v823
    %v825 = vpop.f32.mrb[0].mxu0
    %v826 = vpop.f32.mrb[0].mxu0
    %v827 = vadd.f32 0.0, %v826
    %v828 = vpop.f32.mrb[0].mxu0
    %829 = vdwg.mxu0
    %830 = vrot.lane.b32.xlu0 %v201, 32
    %v831 = vpop.permute.xlu0 %830
    %832 = vrot.lane.b32.xlu0 %v202, 32
    %v833 = vpop.permute.xlu0 %832
    %834 = vrot.lane.b32.xlu0 %v203, 32
    %v835 = vpop.permute.xlu0 %834
    %836 = vrot.lane.b32.xlu0 %v204, 32
    %v837 = vpop.permute.xlu0 %836
    %v843 = vsel %vm559, %v651, 0
    %845 = vmatprep.subr.bf16.mxu0 0
    %846 = vmatpush1.bf16.msra.mxu0 %v831
    %847 = vmatprep.subr.bf16.mxu0 0
    %848 = vmatpush1.bf16.msra.mxu0 %v833
    %849 = vmatprep.subr.bf16.mxu0 0
    %850 = vmatpush1.bf16.msra.mxu0 %v835
    %851 = vmatprep.subr.bf16.mxu0 0
    %852 = vmatpush1.bf16.msra.mxu0 %v837
    %853 = vmatprep.subr.bf16.mxu0 0
    %854 = vmatpush1.bf16.msra.mxu0 0
    %855 = vmatprep.subr.bf16.mxu0 0
    %856 = vmatpush1.bf16.msra.mxu0 0
    %857 = vmatprep.subr.bf16.mxu0 0
    %858 = vmatpush1.bf16.msra.mxu0 0
    %859 = vmatprep.subr.bf16.mxu0 0
    %860 = vmatpush1.bf16.msra.mxu0 0
    %861 = vmatprep.subr.bf16.mxu0 0
    %862 = vmatpush1.bf16.msra.mxu0 0
    %863 = vmatprep.subr.bf16.mxu0 0
    %864 = vmatpush1.bf16.msra.mxu0 0
    %865 = vmatprep.subr.bf16.mxu0 0
    %866 = vmatpush1.bf16.msra.mxu0 0
    %867 = vmatprep.subr.bf16.mxu0 0
    %868 = vmatpush1.bf16.msra.mxu0 0
    %869 = vmatprep.subr.bf16.mxu0 0
    %870 = vmatpush1.bf16.msra.mxu0 0
    %871 = vmatprep.subr.bf16.mxu0 0
    %872 = vmatpush1.bf16.msra.mxu0 0
    %873 = vmatprep.subr.bf16.mxu0 0
    %874 = vmatpush1.bf16.msra.mxu0 0
    %875 = vmatprep.subr.bf16.mxu0 0
    %876 = vmatpush1.bf16.msra.mxu0 0
    %877 = vmatprep.mubr.bf16.mxu0 0
    %878 = vmatmul.mubr.bf16.gmra.mrb[0].mxu0 %v843
    %v879 = vpop.f32.mrb[0].mxu0
    %v880 = vadd.f32 0.0, %v879
    %v881 = vpop.f32.mrb[0].mxu0
    %v882 = vpop.f32.mrb[0].mxu0
    %v883 = vadd.f32 0.0, %v882
    %v884 = vpop.f32.mrb[0].mxu0
    %885 = vdwg.mxu0
    %888 = vrot.lane.b32.xlu0 %v880, 32
    %v889 = vpop.permute.xlu0 %888
    %890 = vrot.lane.b32.xlu0 %v883, 32
    %v891 = vpop.permute.xlu0 %890
    %v894 = vsel %vm75, %v824, %v889
    %v895 = vsel %vm75, %v827, %v891
    %v896 = vadd.f32 %v772, 3.0
    %v897 = vadd.f32 %v773, 3.0
    %v898 = vadd.f32 %v894, 3.0
    %v899 = vadd.f32 %v895, 3.0
    %v900 = vmax.f32 %v896, 0.0
    %v901 = vmax.f32 %v897, 0.0
    %v902 = vmax.f32 %v898, 0.0
    %v903 = vmax.f32 %v899, 0.0
    %v904 = vmin.f32 %v900, 6.0
    %v905 = vmin.f32 %v901, 6.0
    %v906 = vmin.f32 %v902, 6.0
    %v907 = vmin.f32 %v903, 6.0
    %v908 = vmul.f32 %v772, %v904
    %v909 = vmul.f32 %v773, %v905
    %v910 = vmul.f32 %v894, %v906
    %v911 = vmul.f32 %v895, %v907
    %v912 = vpack.c.bf16 %v909, %v908
    %v913 = vpack.c.bf16 %v911, %v910
    %v914 = vld [vmem:[%s5] sm:$0xf]
    %v915 = vld [vmem:[%s5 + $0x4] sm:$0xf]
    %v916 = vld [vmem:[%s5 + $0x8] sm:$0xf]
    %v917 = vld [vmem:[%s5 + $0xc] sm:$0xf]
    %v918 = vld [vmem:[%s5 + $0x10] sm:$0xf]
    %v919 = vld [vmem:[%s5 + $0x14] sm:$0xf]
    %v920 = vld [vmem:[%s5 + $0x18] sm:$0xf]
    %v921 = vld [vmem:[%s5 + $0x1c] sm:$0xf]
    %v922 = vld [vmem:[%s6] sm:$0x1]
    %v924 = vlaneseq
    %v925 = vshrl.u32 %v924, 7
    %v926 = vsub.s32 0, %v925
    %v927 = vrot.slane %v922, %v926
    %v937 = vunpack.c.l.b16 %v914
    %v938 = vunpack.c.l.b16 %v915
    %v939 = vunpack.c.l.b16 %v916
    %v940 = vunpack.c.l.b16 %v917
    %v941 = vunpack.c.l.b16 %v918
    %v942 = vunpack.c.l.b16 %v919
    %v943 = vunpack.c.l.b16 %v920
    %v944 = vunpack.c.l.b16 %v921
    %v945 = vpack.c.b16 %v938, %v937
    %v946 = vpack.c.b16 %v940, %v939
    %v947 = vpack.c.b16 %v942, %v941
    %v948 = vpack.c.b16 %v944, %v943
    %v954 = vsel %vm559, %v912, 0
    %v957 = vsel %vm559, %v913, 0
    %959 = vmatprep.subr.bf16.mxu0 0
    %960 = vmatpush1.bf16.msra.mxu0 %v945
    %961 = vmatprep.subr.bf16.mxu0 0
    %962 = vmatpush1.bf16.msra.mxu0 %v946
    %963 = vmatprep.subr.bf16.mxu0 0
    %964 = vmatpush1.bf16.msra.mxu0 %v947
    %965 = vmatprep.subr.bf16.mxu0 0
    %966 = vmatpush1.bf16.msra.mxu0 %v948
    %967 = vmatprep.subr.bf16.mxu0 0
    %968 = vmatpush1.bf16.msra.mxu0 0
    %969 = vmatprep.subr.bf16.mxu0 0
    %970 = vmatpush1.bf16.msra.mxu0 0
    %971 = vmatprep.subr.bf16.mxu0 0
    %972 = vmatpush1.bf16.msra.mxu0 0
    %973 = vmatprep.subr.bf16.mxu0 0
    %974 = vmatpush1.bf16.msra.mxu0 0
    %975 = vmatprep.subr.bf16.mxu0 0
    %976 = vmatpush1.bf16.msra.mxu0 0
    %977 = vmatprep.subr.bf16.mxu0 0
    %978 = vmatpush1.bf16.msra.mxu0 0
    %979 = vmatprep.subr.bf16.mxu0 0
    %980 = vmatpush1.bf16.msra.mxu0 0
    %981 = vmatprep.subr.bf16.mxu0 0
    %982 = vmatpush1.bf16.msra.mxu0 0
    %983 = vmatprep.subr.bf16.mxu0 0
    %984 = vmatpush1.bf16.msra.mxu0 0
    %985 = vmatprep.subr.bf16.mxu0 0
    %986 = vmatpush1.bf16.msra.mxu0 0
    %987 = vmatprep.subr.bf16.mxu0 0
    %988 = vmatpush1.bf16.msra.mxu0 0
    %989 = vmatprep.subr.bf16.mxu0 0
    %990 = vmatpush1.bf16.msra.mxu0 0
    %991 = vmatprep.mubr.bf16.mxu0 0
    %992 = vmatmul.mubr.bf16.gmra.mrb[0].mxu0 %v954
    %v993 = vpop.f32.mrb[0].mxu0
    %v994 = vadd.f32 %v927, %v993
    %v995 = vpop.f32.mrb[0].mxu0
    %v996 = vpop.f32.mrb[0].mxu0
    %v997 = vadd.f32 %v927, %v996
    %v998 = vpop.f32.mrb[0].mxu0
    %999 = vmatprep.mubr.bf16.mxu0 0
    %1000 = vmatmul.mubr.bf16.gmra.mrb[0].mxu0 %v957
    %v1001 = vpop.f32.mrb[0].mxu0
    %v1002 = vadd.f32 %v927, %v1001
    %v1003 = vpop.f32.mrb[0].mxu0
    %v1004 = vpop.f32.mrb[0].mxu0
    %v1005 = vadd.f32 %v927, %v1004
    %v1006 = vpop.f32.mrb[0].mxu0
    %1007 = vdwg.mxu0
    %1008 = vst.msk [vmem:[#allocation2] sm:$0xff] %vm75, %v994
    %1009 = vst.msk [vmem:[#allocation2 + $0x8] sm:$0xff] %vm75, %v997
    %1010 = vst.msk [vmem:[#allocation2 + $0x10] sm:$0xff] %vm75, %v1002
    %1011 = vst.msk [vmem:[#allocation2 + $0x18] sm:$0xff] %vm75, %v1005
    // Predicated region
    $region30: #{tpu_custom_call.1} parent=1 // pred_check
      _
    $region31: #{tpu_custom_call.1} parent=1 // pred_check_branch
      %1013 = sbr.rel (0) target = $region33
    $region32: #{tpu_custom_call.1} parent=1 // pred_region
      %s1015 = ssub.s32 512, 512
      %1016 = vsyncadd [#allocation3], %s1015
      %s1017 = sshll.u32 [#allocation2], 4
      %s1018 = int_to_ptr.vmem [resolvable:$true] %s1017
      %1023 = dma.vmem_to_hbm [thread:$0]  %s1018, 512, %s7, [#allocation3], 128, 128, 8
    $region33: #{tpu_custom_call.1} parent=1 // pred_fallthru
      _
    // Predicated region
    $region34: #{tpu_custom_call.1} parent=1 // pred_check
      _
    $region35: #{tpu_custom_call.1} parent=1 // pred_check_branch
      %1025 = sbr.rel (0) target = $region37
    $region36: #{tpu_custom_call.1} parent=1 // pred_region
      %1026 = dma.done [#allocation3], 512
    $region37: #{tpu_custom_call.1} parent=1 // pred_fallthru
      _
    %1027 = vsyncpa [#allocation3], 1

</llo_original>
